<compile_context>
chip_gen: v7x
topology: tpu7x:2x2x1
jax: 0.10.0
libtpu: 0.0.40
codegen_flags: <defaults>
</compile_context>

<pallas_src>
import jax
import jax.numpy as jnp
from jax.experimental import pallas as pl
from jax.experimental.pallas import tpu as pltpu

# ---------------- configuration (small, forward-consistent shapes) ----------------
B = 2            # batch
T = 8            # sequence length
VOCAB = 50       # word alphabet size
WORD_EMB = 32    # word embedding dim
FEAT_VOCAB = 10  # feature alphabet size
FEAT_EMB = 8     # feature embedding dim
D_IN = WORD_EMB + FEAT_EMB      # 40
HIDDEN = 64      # HP_hidden_dim
CNN_LAYER = 2    # HP_cnn_layer
KERNEL = 3       # CNN kernel size (padding = 1)
LABELS = 7 + 2   # label_alphabet_size + 2 (as in SeqModel.__init__)
BN_EPS = 1e-5


# ---------------------------------- Pallas kernel ----------------------------------
def seqmodel_kernel(aux_ref, emb_ref,
                    w2c_w_ref, w2c_b_ref,
                    conv_w_ref, conv_b_ref,
                    bn_scale_ref, bn_shift_ref,
                    h2t_w_ref, h2t_b_ref,
                    out_ref):
    bt = aux_ref.shape[0]                                     # B*T rows

    word_id = aux_ref[:, 0:1]                                 # (bt, 1) int32
    feat_id = aux_ref[:, 1:2]                                 # (bt, 1) int32
    mask_col = aux_ref[:, 2:3]                                # (bt, 1) int32

    # --- fused embedding gather + concat: exact one-hot matmul against the combined
    #     block-diagonal table (word rows 0..VOCAB-1, feature rows VOCAB..VOCAB+FEAT-1) ---
    vocab_total = emb_ref.shape[0]                            # VOCAB + FEAT_VOCAB
    lane = jax.lax.broadcasted_iota(jnp.int32, (bt, vocab_total), 1)
    onehot = ((lane == word_id) | (lane == (feat_id + VOCAB))).astype(jnp.float32)
    word_rep = jnp.dot(onehot, emb_ref[...],
                       preferred_element_type=jnp.float32)    # (bt, D_IN)

    # --- word2cnn linear + tanh ---
    h = jnp.tanh(
        jnp.dot(word_rep, w2c_w_ref[...], preferred_element_type=jnp.float32)
        + w2c_b_ref[...]
    )                                                         # (bt, HIDDEN)

    # hoisted full-width boundary multipliers (computed once, used by every layer)
    row_t = jax.lax.broadcasted_iota(jnp.int32, (bt, HIDDEN), 0) % T
    left_ok = (row_t > 0).astype(jnp.float32)                 # x[t-1] exists
    right_ok = (row_t < (T - 1)).astype(jnp.float32)          # x[t+1] exists

    # --- Conv1d(k=3, pad=1) + ReLU + folded eval-BatchNorm, per layer ---
    for layer in range(CNN_LAYER):
        # time shifts via XLU roll on the sublane (row) axis; boundary rows zeroed
        h_left = pltpu.roll(h, shift=1, axis=0) * left_ok
        h_right = pltpu.roll(h, shift=bt - 1, axis=0) * right_ok

        # three small true-size (K=HIDDEN) dots accumulated — no zero-padded contraction,
        # no lane-concat temporary
        y = (jnp.dot(h_left, conv_w_ref[KERNEL * layer + 0],
                     preferred_element_type=jnp.float32)
             + jnp.dot(h, conv_w_ref[KERNEL * layer + 1],
                       preferred_element_type=jnp.float32)
             + jnp.dot(h_right, conv_w_ref[KERNEL * layer + 2],
                       preferred_element_type=jnp.float32)
             + conv_b_ref[layer])                             # (bt, HIDDEN)

        # ReLU, then eval-mode BatchNorm pre-folded to per-channel scale/shift
        h = jnp.maximum(y, 0.0) * bn_scale_ref[layer] + bn_shift_ref[layer]

    # --- hidden2tag linear (true label width, no pad bias needed) ---
    logits = (jnp.dot(h, h2t_w_ref[...], preferred_element_type=jnp.float32)
              + h2t_b_ref[...])                               # (bt, LABELS)

    # --- first-index argmax over lanes (matches jnp.argmax / torch.max semantics) ---
    max_val = jnp.max(logits, axis=-1, keepdims=True)
    ids = jax.lax.broadcasted_iota(jnp.int32, logits.shape, 1)
    cand = jnp.where(logits >= max_val, ids, jnp.int32(logits.shape[1]))
    tag_col = jnp.min(cand, axis=-1, keepdims=True)           # (bt, 1) int32
    tag_col = tag_col * mask_col                              # mask.long() * tag_seq

    # --- lane-dense output: diagonal-embed the (bt,1) tags and sublane-sum -> (1, bt) ---
    rr = jax.lax.broadcasted_iota(jnp.int32, (bt, bt), 0)
    cc = jax.lax.broadcasted_iota(jnp.int32, (bt, bt), 1)
    diag = jnp.where(rr == cc, tag_col.astype(jnp.float32), 0.0)   # (bt, bt)
    out_ref[...] = jnp.sum(diag, axis=0, keepdims=True).astype(jnp.int32)  # (1, bt)


# ---------------------------- parameter prep (fold, no padding) --------------------
def prepare_params(params):
    f32 = jnp.float32

    # combined block-diagonal embedding table: rows 0..49 word (cols 0..31),
    # rows 50..59 feature (cols 32..39) -> concat comes out of a single exact matmul
    emb = jnp.zeros((VOCAB + FEAT_VOCAB, D_IN), f32)
    emb = emb.at[:VOCAB, :WORD_EMB].set(params["word_emb"])
    emb = emb.at[VOCAB:, WORD_EMB:].set(params["feat_emb"])

    # eval-mode BatchNorm folded to per-channel affine (BN sits AFTER ReLU in NCRF++)
    scale = params["bn_g"][:, 0, :] / jnp.sqrt(params["bn_v"][:, 0, :] + BN_EPS)
    shift = params["bn_b"][:, 0, :] - params["bn_m"][:, 0, :] * scale

    return {
        "emb": emb,                                                    # (60, 40)
        "w2c_w": params["w2c_w"].astype(f32),                          # (40, 64)
        "w2c_b": params["w2c_b"].astype(f32),                          # (1, 64)
        "conv_w": params["conv_w"].reshape(CNN_LAYER * KERNEL,
                                           HIDDEN, HIDDEN).astype(f32),  # (6, 64, 64)
        "conv_b": params["conv_b"].astype(f32),                        # (2, 1, 64)
        "bn_scale": scale[:, None, :].astype(f32),                     # (2, 1, 64)
        "bn_shift": shift[:, None, :].astype(f32),                     # (2, 1, 64)
        "h2t_w": params["h2t_w"].astype(f32),                          # (64, 9)
        "h2t_b": params["h2t_b"].astype(f32),                          # (1, 9)
    }


# --------------------------------- wrapper (glue) ----------------------------------
@jax.jit
def seqmodel_forward(prepped, word_inputs, feature_inputs, word_seq_lengths, mask):
    # word_seq_lengths is unused by the CNN extractor path (matches NCRF++ CNN branch).
    del word_seq_lengths

    # one tiny int32 slab carries ids + mask; embedding gather happens in-kernel
    aux = jnp.stack(
        [word_inputs.reshape(-1).astype(jnp.int32),
         feature_inputs.reshape(-1).astype(jnp.int32),
         mask.reshape(-1).astype(jnp.int32)], axis=-1)        # (B*T, 3)

    vmem = pl.BlockSpec(memory_space=pltpu.MemorySpace.VMEM)
    out = pl.pallas_call(
        seqmodel_kernel,
        out_shape=jax.ShapeDtypeStruct((1, B * T), jnp.int32),
        in_specs=[vmem] * 10,
        out_specs=vmem,
    )(aux, prepped["emb"],
      prepped["w2c_w"], prepped["w2c_b"],
      prepped["conv_w"], prepped["conv_b"],
      prepped["bn_scale"], prepped["bn_shift"],
      prepped["h2t_w"], prepped["h2t_b"])
    return out.reshape(B, T)


# ------------------------------ pure-JAX reference ---------------------------------
def seqmodel_reference(params, word_inputs, feature_inputs, mask):
    word_e = params["word_emb"][word_inputs]
    feat_e = params["feat_emb"][feature_inputs]
    x = jnp.concatenate([word_e, feat_e], axis=-1).astype(jnp.float32)
    h = jnp.tanh(jnp.einsum("btd,dh->bth", x, params["w2c_w"]) + params["w2c_b"][0])
    for layer in range(CNN_LAYER):
        zero = jnp.zeros((B, 1, HIDDEN), jnp.float32)
        h_left = jnp.concatenate([zero, h[:, :-1, :]], axis=1)
        h_right = jnp.concatenate([h[:, 1:, :], zero], axis=1)
        y = (jnp.einsum("bth,hc->btc", h_left, params["conv_w"][layer, 0])
             + jnp.einsum("bth,hc->btc", h, params["conv_w"][layer, 1])
             + jnp.einsum("bth,hc->btc", h_right, params["conv_w"][layer, 2])
             + params["conv_b"][layer, 0])
        y = jnp.maximum(y, 0.0)
        y = ((y - params["bn_m"][layer, 0]) / jnp.sqrt(params["bn_v"][layer, 0] + BN_EPS)
             * params["bn_g"][layer, 0] + params["bn_b"][layer, 0])
        h = y
    logits = jnp.einsum("bth,hl->btl", h, params["h2t_w"]) + params["h2t_b"][0]
    tag = jnp.argmax(logits, axis=-1).astype(jnp.int32)
    return tag * mask.astype(jnp.int32)


# -------------------------------------- main ---------------------------------------
def make_params(key):
    ks = jax.random.split(key, 12)

    def u(k, shape, scale):
        return (jax.random.uniform(k, shape, jnp.float32) * 2.0 - 1.0) * scale

    params = {
        "word_emb": u(ks[0], (VOCAB, WORD_EMB), 0.5),
        "feat_emb": u(ks[1], (FEAT_VOCAB, FEAT_EMB), 0.5),
        "w2c_w": u(ks[2], (D_IN, HIDDEN), 0.2),
        "w2c_b": u(ks[3], (1, HIDDEN), 0.1),
        # conv_w[l, k, in, out] corresponds to torch Conv1d weight[out, in, k] of layer l
        "conv_w": u(ks[4], (CNN_LAYER, KERNEL, HIDDEN, HIDDEN), 0.1),
        "conv_b": u(ks[5], (CNN_LAYER, 1, HIDDEN), 0.1),
        # non-trivial BatchNorm1d running stats (eval mode) to exercise the BN path
        "bn_g": 0.5 + jax.random.uniform(ks[6], (CNN_LAYER, 1, HIDDEN), jnp.float32),
        "bn_b": u(ks[7], (CNN_LAYER, 1, HIDDEN), 0.1),
        "bn_m": u(ks[8], (CNN_LAYER, 1, HIDDEN), 0.1),
        "bn_v": 0.5 + jax.random.uniform(ks[9], (CNN_LAYER, 1, HIDDEN), jnp.float32),
        "h2t_w": u(ks[10], (HIDDEN, LABELS), 0.2),
        "h2t_b": u(ks[11], (1, LABELS), 0.1),
    }
    return params


if __name__ == "__main__":
    key = jax.random.PRNGKey(0)
    kp, kw, kf = jax.random.split(key, 3)

    params = make_params(kp)
    prepped = prepare_params(params)

    word_inputs = jax.random.randint(kw, (B, T), 1, VOCAB, dtype=jnp.int32)
    feature_inputs = jax.random.randint(kf, (B, T), 1, FEAT_VOCAB, dtype=jnp.int32)
    word_seq_lengths = jnp.array([T, 5], dtype=jnp.int32)
    mask = (jnp.arange(T)[None, :] < word_seq_lengths[:, None])          # (B, T) bool

    tag_seq = seqmodel_forward(prepped, word_inputs, feature_inputs,
                               word_seq_lengths, mask)
    tag_seq = jax.block_until_ready(tag_seq)

    ref = seqmodel_reference(params, word_inputs, feature_inputs, mask)
    assert tag_seq.shape == (B, T) and tag_seq.dtype == jnp.int32
    assert bool(jnp.all(tag_seq == ref)), (tag_seq, ref)

    print("KERNEL_OK")
</pallas_src>

<mosaic_0001>
module attributes {stable_mosaic.version = 11 : i64} {
  func.func @seqmodel_kernel(%arg0: memref<16x3xi32, #tpu.memory_space<vmem>>, %arg1: memref<60x40xf32, #tpu.memory_space<vmem>>, %arg2: memref<40x64xf32, #tpu.memory_space<vmem>>, %arg3: memref<1x64xf32, #tpu.memory_space<vmem>>, %arg4: memref<6x64x64xf32, #tpu.memory_space<vmem>>, %arg5: memref<2x1x64xf32, #tpu.memory_space<vmem>>, %arg6: memref<2x1x64xf32, #tpu.memory_space<vmem>>, %arg7: memref<2x1x64xf32, #tpu.memory_space<vmem>>, %arg8: memref<64x9xf32, #tpu.memory_space<vmem>>, %arg9: memref<1x9xf32, #tpu.memory_space<vmem>>, %arg10: memref<1x16xi32, #tpu.memory_space<vmem>>) attributes {dimension_semantics = [], scalar_prefetch = 0 : i64, scratch_operands = 0 : i64, tpu.core_type = #tpu.core_type<tc>} {
    %c0 = arith.constant 0 : index
    %c0_0 = arith.constant 0 : index
    %0 = vector.load %arg0[%c0, %c0_0] : memref<16x3xi32, #tpu.memory_space<vmem>>, vector<16x1xi32>
    %c0_1 = arith.constant 0 : index
    %c1 = arith.constant 1 : index
    %1 = vector.load %arg0[%c0_1, %c1] : memref<16x3xi32, #tpu.memory_space<vmem>>, vector<16x1xi32>
    %c0_2 = arith.constant 0 : index
    %c2 = arith.constant 2 : index
    %2 = vector.load %arg0[%c0_2, %c2] : memref<16x3xi32, #tpu.memory_space<vmem>>, vector<16x1xi32>
    %3 = tpu.iota {dimensions = array<i32: 1>} : vector<16x60xi32>
    %4 = vector.broadcast %0 : vector<16x1xi32> to vector<16x60xi32>
    %5 = arith.cmpi eq, %3, %4 : vector<16x60xi32>
    %c50_i32 = arith.constant 50 : i32
    %6 = vector.broadcast %c50_i32 : i32 to vector<16x1xi32>
    %7 = arith.addi %1, %6 : vector<16x1xi32>
    %8 = vector.broadcast %7 : vector<16x1xi32> to vector<16x60xi32>
    %9 = arith.cmpi eq, %3, %8 : vector<16x60xi32>
    %10 = arith.ori %5, %9 : vector<16x60xi1>
    %11 = arith.extui %10 : vector<16x60xi1> to vector<16x60xi32>
    %12 = arith.sitofp %11 : vector<16x60xi32> to vector<16x60xf32>
    %c0_3 = arith.constant 0 : index
    %c0_4 = arith.constant 0 : index
    %13 = vector.load %arg1[%c0_3, %c0_4] : memref<60x40xf32, #tpu.memory_space<vmem>>, vector<60x40xf32>
    %cst = arith.constant dense<0.000000e+00> : vector<16x40xf32>
    %14 = tpu.matmul %12, %13, %cst {dimension_numbers = #tpu.dot_dimension_numbers<[1], [0], [0], [1], [0, 0, 1, 1], [], []>} : vector<16x60xf32>, vector<60x40xf32>, vector<16x40xf32> -> vector<16x40xf32>
    %c0_5 = arith.constant 0 : index
    %c0_6 = arith.constant 0 : index
    %15 = vector.load %arg2[%c0_5, %c0_6] : memref<40x64xf32, #tpu.memory_space<vmem>>, vector<40x64xf32>
    %cst_7 = arith.constant dense<0.000000e+00> : vector<16x64xf32>
    %16 = tpu.matmul %14, %15, %cst_7 {dimension_numbers = #tpu.dot_dimension_numbers<[1], [0], [0], [1], [0, 0, 1, 1], [], []>} : vector<16x40xf32>, vector<40x64xf32>, vector<16x64xf32> -> vector<16x64xf32>
    %c0_8 = arith.constant 0 : index
    %c0_9 = arith.constant 0 : index
    %17 = vector.load %arg3[%c0_8, %c0_9] : memref<1x64xf32, #tpu.memory_space<vmem>>, vector<1x64xf32>
    %18 = vector.broadcast %17 : vector<1x64xf32> to vector<16x64xf32>
    %19 = arith.addf %16, %18 : vector<16x64xf32>
    %20 = math.tanh %19 : vector<16x64xf32>
    %21 = tpu.iota {dimensions = array<i32: 0>} : vector<16x64xi32>
    %c8_i32 = arith.constant 8 : i32
    %c0_i32 = arith.constant 0 : i32
    %22 = arith.cmpi eq, %c8_i32, %c0_i32 : i32
    %c1_i32 = arith.constant 1 : i32
    %23 = arith.select %22, %c1_i32, %c8_i32 : i32
    %24 = vector.broadcast %23 : i32 to vector<16x64xi32>
    %25 = arith.remsi %21, %24 : vector<16x64xi32>
    %c0_i32_10 = arith.constant 0 : i32
    %26 = vector.broadcast %c0_i32_10 : i32 to vector<16x64xi32>
    %27 = arith.cmpi ne, %25, %26 : vector<16x64xi32>
    %c0_i32_11 = arith.constant 0 : i32
    %28 = vector.broadcast %c0_i32_11 : i32 to vector<16x64xi32>
    %29 = arith.cmpi slt, %25, %28 : vector<16x64xi32>
    %c0_i32_12 = arith.constant 0 : i32
    %30 = arith.cmpi slt, %23, %c0_i32_12 : i32
    %31 = vector.broadcast %30 : i1 to vector<16x64xi1>
    %32 = vector.broadcast %31 : vector<16x64xi1> to vector<16x64xi1>
    %33 = arith.xori %29, %32 : vector<16x64xi1>
    %34 = arith.andi %33, %27 : vector<16x64xi1>
    %35 = vector.broadcast %23 : i32 to vector<16x64xi32>
    %36 = arith.addi %25, %35 : vector<16x64xi32>
    %37 = arith.select %34, %36, %25 : vector<16x64xi1>, vector<16x64xi32>
    %c0_i32_13 = arith.constant 0 : i32
    %38 = vector.broadcast %c0_i32_13 : i32 to vector<16x64xi32>
    %39 = arith.cmpi sgt, %37, %38 : vector<16x64xi32>
    %40 = arith.extui %39 : vector<16x64xi1> to vector<16x64xi32>
    %41 = arith.sitofp %40 : vector<16x64xi32> to vector<16x64xf32>
    %c7_i32 = arith.constant 7 : i32
    %42 = vector.broadcast %c7_i32 : i32 to vector<16x64xi32>
    %43 = arith.cmpi slt, %37, %42 : vector<16x64xi32>
    %44 = arith.extui %43 : vector<16x64xi1> to vector<16x64xi32>
    %45 = arith.sitofp %44 : vector<16x64xi32> to vector<16x64xf32>
    %c1_i32_14 = arith.constant 1 : i32
    %46 = tpu.dynamic_rotate %20 by %c1_i32_14 dim 0 : vector<16x64xf32>, i32 -> vector<16x64xf32>
    %47 = arith.mulf %46, %41 : vector<16x64xf32>
    %c15_i32 = arith.constant 15 : i32
    %48 = tpu.dynamic_rotate %20 by %c15_i32 dim 0 : vector<16x64xf32>, i32 -> vector<16x64xf32>
    %49 = arith.mulf %48, %45 : vector<16x64xf32>
    %c0_15 = arith.constant 0 : index
    %c0_16 = arith.constant 0 : index
    %c0_17 = arith.constant 0 : index
    %50 = vector.load %arg4[%c0_15, %c0_16, %c0_17] : memref<6x64x64xf32, #tpu.memory_space<vmem>>, vector<1x64x64xf32>
    %51 = vector.shape_cast %50 : vector<1x64x64xf32> to vector<64x64xf32>
    %cst_18 = arith.constant dense<0.000000e+00> : vector<16x64xf32>
    %52 = tpu.matmul %47, %51, %cst_18 {dimension_numbers = #tpu.dot_dimension_numbers<[1], [0], [0], [1], [0, 0, 1, 1], [], []>} : vector<16x64xf32>, vector<64x64xf32>, vector<16x64xf32> -> vector<16x64xf32>
    %c1_19 = arith.constant 1 : index
    %c0_20 = arith.constant 0 : index
    %c0_21 = arith.constant 0 : index
    %53 = vector.load %arg4[%c1_19, %c0_20, %c0_21] : memref<6x64x64xf32, #tpu.memory_space<vmem>>, vector<1x64x64xf32>
    %54 = vector.shape_cast %53 : vector<1x64x64xf32> to vector<64x64xf32>
    %cst_22 = arith.constant dense<0.000000e+00> : vector<16x64xf32>
    %55 = tpu.matmul %20, %54, %cst_22 {dimension_numbers = #tpu.dot_dimension_numbers<[1], [0], [0], [1], [0, 0, 1, 1], [], []>} : vector<16x64xf32>, vector<64x64xf32>, vector<16x64xf32> -> vector<16x64xf32>
    %56 = arith.addf %52, %55 : vector<16x64xf32>
    %c2_23 = arith.constant 2 : index
    %c0_24 = arith.constant 0 : index
    %c0_25 = arith.constant 0 : index
    %57 = vector.load %arg4[%c2_23, %c0_24, %c0_25] : memref<6x64x64xf32, #tpu.memory_space<vmem>>, vector<1x64x64xf32>
    %58 = vector.shape_cast %57 : vector<1x64x64xf32> to vector<64x64xf32>
    %cst_26 = arith.constant dense<0.000000e+00> : vector<16x64xf32>
    %59 = tpu.matmul %49, %58, %cst_26 {dimension_numbers = #tpu.dot_dimension_numbers<[1], [0], [0], [1], [0, 0, 1, 1], [], []>} : vector<16x64xf32>, vector<64x64xf32>, vector<16x64xf32> -> vector<16x64xf32>
    %60 = arith.addf %56, %59 : vector<16x64xf32>
    %c0_27 = arith.constant 0 : index
    %c0_28 = arith.constant 0 : index
    %c0_29 = arith.constant 0 : index
    %61 = vector.load %arg5[%c0_27, %c0_28, %c0_29] : memref<2x1x64xf32, #tpu.memory_space<vmem>>, vector<1x1x64xf32>
    %62 = vector.shape_cast %61 : vector<1x1x64xf32> to vector<1x64xf32>
    %63 = vector.broadcast %62 : vector<1x64xf32> to vector<16x64xf32>
    %64 = arith.addf %60, %63 : vector<16x64xf32>
    %cst_30 = arith.constant 0.000000e+00 : f32
    %65 = vector.broadcast %cst_30 : f32 to vector<16x64xf32>
    %66 = arith.maximumf %64, %65 : vector<16x64xf32>
    %c0_31 = arith.constant 0 : index
    %c0_32 = arith.constant 0 : index
    %c0_33 = arith.constant 0 : index
    %67 = vector.load %arg6[%c0_31, %c0_32, %c0_33] : memref<2x1x64xf32, #tpu.memory_space<vmem>>, vector<1x1x64xf32>
    %68 = vector.shape_cast %67 : vector<1x1x64xf32> to vector<1x64xf32>
    %69 = vector.broadcast %68 : vector<1x64xf32> to vector<16x64xf32>
    %70 = arith.mulf %66, %69 : vector<16x64xf32>
    %c0_34 = arith.constant 0 : index
    %c0_35 = arith.constant 0 : index
    %c0_36 = arith.constant 0 : index
    %71 = vector.load %arg7[%c0_34, %c0_35, %c0_36] : memref<2x1x64xf32, #tpu.memory_space<vmem>>, vector<1x1x64xf32>
    %72 = vector.shape_cast %71 : vector<1x1x64xf32> to vector<1x64xf32>
    %73 = vector.broadcast %72 : vector<1x64xf32> to vector<16x64xf32>
    %74 = arith.addf %70, %73 : vector<16x64xf32>
    %c1_i32_37 = arith.constant 1 : i32
    %75 = tpu.dynamic_rotate %74 by %c1_i32_37 dim 0 : vector<16x64xf32>, i32 -> vector<16x64xf32>
    %76 = arith.mulf %75, %41 : vector<16x64xf32>
    %c15_i32_38 = arith.constant 15 : i32
    %77 = tpu.dynamic_rotate %74 by %c15_i32_38 dim 0 : vector<16x64xf32>, i32 -> vector<16x64xf32>
    %78 = arith.mulf %77, %45 : vector<16x64xf32>
    %c3 = arith.constant 3 : index
    %c0_39 = arith.constant 0 : index
    %c0_40 = arith.constant 0 : index
    %79 = vector.load %arg4[%c3, %c0_39, %c0_40] : memref<6x64x64xf32, #tpu.memory_space<vmem>>, vector<1x64x64xf32>
    %80 = vector.shape_cast %79 : vector<1x64x64xf32> to vector<64x64xf32>
    %cst_41 = arith.constant dense<0.000000e+00> : vector<16x64xf32>
    %81 = tpu.matmul %76, %80, %cst_41 {dimension_numbers = #tpu.dot_dimension_numbers<[1], [0], [0], [1], [0, 0, 1, 1], [], []>} : vector<16x64xf32>, vector<64x64xf32>, vector<16x64xf32> -> vector<16x64xf32>
    %c4 = arith.constant 4 : index
    %c0_42 = arith.constant 0 : index
    %c0_43 = arith.constant 0 : index
    %82 = vector.load %arg4[%c4, %c0_42, %c0_43] : memref<6x64x64xf32, #tpu.memory_space<vmem>>, vector<1x64x64xf32>
    %83 = vector.shape_cast %82 : vector<1x64x64xf32> to vector<64x64xf32>
    %cst_44 = arith.constant dense<0.000000e+00> : vector<16x64xf32>
    %84 = tpu.matmul %74, %83, %cst_44 {dimension_numbers = #tpu.dot_dimension_numbers<[1], [0], [0], [1], [0, 0, 1, 1], [], []>} : vector<16x64xf32>, vector<64x64xf32>, vector<16x64xf32> -> vector<16x64xf32>
    %85 = arith.addf %81, %84 : vector<16x64xf32>
    %c5 = arith.constant 5 : index
    %c0_45 = arith.constant 0 : index
    %c0_46 = arith.constant 0 : index
    %86 = vector.load %arg4[%c5, %c0_45, %c0_46] : memref<6x64x64xf32, #tpu.memory_space<vmem>>, vector<1x64x64xf32>
    %87 = vector.shape_cast %86 : vector<1x64x64xf32> to vector<64x64xf32>
    %cst_47 = arith.constant dense<0.000000e+00> : vector<16x64xf32>
    %88 = tpu.matmul %78, %87, %cst_47 {dimension_numbers = #tpu.dot_dimension_numbers<[1], [0], [0], [1], [0, 0, 1, 1], [], []>} : vector<16x64xf32>, vector<64x64xf32>, vector<16x64xf32> -> vector<16x64xf32>
    %89 = arith.addf %85, %88 : vector<16x64xf32>
    %c1_48 = arith.constant 1 : index
    %c0_49 = arith.constant 0 : index
    %c0_50 = arith.constant 0 : index
    %90 = vector.load %arg5[%c1_48, %c0_49, %c0_50] : memref<2x1x64xf32, #tpu.memory_space<vmem>>, vector<1x1x64xf32>
    %91 = vector.shape_cast %90 : vector<1x1x64xf32> to vector<1x64xf32>
    %92 = vector.broadcast %91 : vector<1x64xf32> to vector<16x64xf32>
    %93 = arith.addf %89, %92 : vector<16x64xf32>
    %cst_51 = arith.constant 0.000000e+00 : f32
    %94 = vector.broadcast %cst_51 : f32 to vector<16x64xf32>
    %95 = arith.maximumf %93, %94 : vector<16x64xf32>
    %c1_52 = arith.constant 1 : index
    %c0_53 = arith.constant 0 : index
    %c0_54 = arith.constant 0 : index
    %96 = vector.load %arg6[%c1_52, %c0_53, %c0_54] : memref<2x1x64xf32, #tpu.memory_space<vmem>>, vector<1x1x64xf32>
    %97 = vector.shape_cast %96 : vector<1x1x64xf32> to vector<1x64xf32>
    %98 = vector.broadcast %97 : vector<1x64xf32> to vector<16x64xf32>
    %99 = arith.mulf %95, %98 : vector<16x64xf32>
    %c1_55 = arith.constant 1 : index
    %c0_56 = arith.constant 0 : index
    %c0_57 = arith.constant 0 : index
    %100 = vector.load %arg7[%c1_55, %c0_56, %c0_57] : memref<2x1x64xf32, #tpu.memory_space<vmem>>, vector<1x1x64xf32>
    %101 = vector.shape_cast %100 : vector<1x1x64xf32> to vector<1x64xf32>
    %102 = vector.broadcast %101 : vector<1x64xf32> to vector<16x64xf32>
    %103 = arith.addf %99, %102 : vector<16x64xf32>
    %c0_58 = arith.constant 0 : index
    %c0_59 = arith.constant 0 : index
    %104 = vector.load %arg8[%c0_58, %c0_59] : memref<64x9xf32, #tpu.memory_space<vmem>>, vector<64x9xf32>
    %cst_60 = arith.constant dense<0.000000e+00> : vector<16x9xf32>
    %105 = tpu.matmul %103, %104, %cst_60 {dimension_numbers = #tpu.dot_dimension_numbers<[1], [0], [0], [1], [0, 0, 1, 1], [], []>} : vector<16x64xf32>, vector<64x9xf32>, vector<16x9xf32> -> vector<16x9xf32>
    %c0_61 = arith.constant 0 : index
    %c0_62 = arith.constant 0 : index
    %106 = vector.load %arg9[%c0_61, %c0_62] : memref<1x9xf32, #tpu.memory_space<vmem>>, vector<1x9xf32>
    %107 = vector.broadcast %106 : vector<1x9xf32> to vector<16x9xf32>
    %108 = arith.addf %105, %107 : vector<16x9xf32>
    %cst_63 = arith.constant dense<0xFF800000> : vector<16xf32>
    %109 = vector.multi_reduction <maximumf>, %108, %cst_63 [1] : vector<16x9xf32> to vector<16xf32>
    %110 = vector.shape_cast %109 : vector<16xf32> to vector<16x1xf32>
    %111 = tpu.iota {dimensions = array<i32: 1>} : vector<16x9xi32>
    %112 = vector.broadcast %110 : vector<16x1xf32> to vector<16x9xf32>
    %113 = arith.cmpf oge, %108, %112 : vector<16x9xf32>
    %c9_i32 = arith.constant 9 : i32
    %114 = vector.broadcast %c9_i32 : i32 to vector<16x9xi32>
    %115 = arith.select %113, %111, %114 : vector<16x9xi1>, vector<16x9xi32>
    %cst_64 = arith.constant dense<2147483647> : vector<16xi32>
    %116 = vector.multi_reduction <minsi>, %115, %cst_64 [1] : vector<16x9xi32> to vector<16xi32>
    %117 = vector.shape_cast %116 : vector<16xi32> to vector<16x1xi32>
    %118 = arith.muli %117, %2 : vector<16x1xi32>
    %119 = tpu.iota {dimensions = array<i32: 0>} : vector<16x16xi32>
    %120 = tpu.iota {dimensions = array<i32: 1>} : vector<16x16xi32>
    %121 = arith.cmpi eq, %119, %120 : vector<16x16xi32>
    %122 = arith.sitofp %118 : vector<16x1xi32> to vector<16x1xf32>
    %cst_65 = arith.constant 0.000000e+00 : f32
    %123 = vector.shape_cast %122 : vector<16x1xf32> to vector<16x1xf32>
    %124 = vector.broadcast %123 : vector<16x1xf32> to vector<16x16xf32>
    %125 = vector.broadcast %cst_65 : f32 to vector<16x16xf32>
    %126 = arith.select %121, %124, %125 : vector<16x16xi1>, vector<16x16xf32>
    %cst_66 = arith.constant dense<0.000000e+00> : vector<16xf32>
    %127 = vector.multi_reduction <add>, %126, %cst_66 [0] : vector<16x16xf32> to vector<16xf32>
    %128 = vector.shape_cast %127 : vector<16xf32> to vector<1x16xf32>
    %129 = arith.fptosi %128 : vector<1x16xf32> to vector<1x16xi32>
    %c0_67 = arith.constant 0 : index
    %c0_68 = arith.constant 0 : index
    %130 = vector.load %arg10[%c0_67, %c0_68] : memref<1x16xi32, #tpu.memory_space<vmem>>, vector<1x16xi32>
    tpu.vector_store %arg10[%c0_67, %c0_68], %129 {strides = array<i32>} : memref<1x16xi32, #tpu.memory_space<vmem>>, vector<1x16xi32>,
    return
  }
}

</mosaic_0001>

<llo_original>
// kernel: seqmodel_forward.1
$region0: #{seqmodel_forward.1}
  #allocation0 [shape = 'u32[]', space=smem, size = 0x4, offset = 0x4, fixed_abs, tag = 'smem constant byte address 0x4 - core index']
  #allocation1 [shape = 'u32[144,128]{1,0:T(1,128)}', space=vmem, size = 0x12000, scoped, tag = 'internal scratch']
  %s0 = inlined_call_operand.vmem [shape: s32[16,3], index: 0, kind: input, shape index: {}]
  %s1 = inlined_call_operand.vmem [shape: f32[60,40], index: 1, kind: input, shape index: {}]
  %s2 = inlined_call_operand.vmem [shape: f32[40,64], index: 2, kind: input, shape index: {}]
  %s3 = inlined_call_operand.vmem [shape: f32[1,64], index: 3, kind: input, shape index: {}]
  %s4 = inlined_call_operand.hbm [shape: f32[6,64,64], index: 4, kind: input, shape index: {}]
  %s5 = inlined_call_operand.vmem [shape: f32[2,1,64], index: 5, kind: input, shape index: {}]
  %s6 = inlined_call_operand.vmem [shape: f32[2,1,64], index: 6, kind: input, shape index: {}]
  %s7 = inlined_call_operand.vmem [shape: f32[2,1,64], index: 7, kind: input, shape index: {}]
  %s8 = inlined_call_operand.vmem [shape: f32[64,9], index: 8, kind: input, shape index: {}]
  %s9 = inlined_call_operand.vmem [shape: f32[1,9], index: 9, kind: input, shape index: {}]
  %s10 = inlined_call_operand.vmem [shape: s32[1,16], index: 10, kind: output, shape index: {}]
  %s11 = sld [smem:[#allocation0]]
  $region54: #{seqmodel_forward.1} parent=0
    _
  %s13 = ssub.s32 1, %s11
  %s14 = scalar_select 0, %s13, %s11
  $region1: #{seqmodel_forward.1} parent=0
    #allocation2 [shape = 'u8[196608]{0}', space=vmem, size = 0x30000, scoped, tag = 'input window, operand 4, single buffered']
    #allocation3 [shape = 's32[1]{0}', space=sflag, size = 0x4, scoped, tag = 'scoped memory for seqmodel_forward.1']
    %15 = vsyncpa [#allocation3], 0
    // Predicated region
    $region2: #{seqmodel_forward.1} parent=1 // pred_check
      _
    $region3: #{seqmodel_forward.1} parent=1 // pred_check_branch
      %17 = sbr.rel (0) target = $region5
    $region4: #{seqmodel_forward.1} parent=1 // pred_region
      _
    $region5: #{seqmodel_forward.1} parent=1 // pred_fallthru
      _
    // Predicated region
    $region6: #{seqmodel_forward.1} parent=1 // pred_check
      _
    $region7: #{seqmodel_forward.1} parent=1 // pred_check_branch
      %19 = sbr.rel (0) target = $region9
    $region8: #{seqmodel_forward.1} parent=1 // pred_region
      _
    $region9: #{seqmodel_forward.1} parent=1 // pred_fallthru
      _
    // Predicated region
    $region10: #{seqmodel_forward.1} parent=1 // pred_check
      _
    $region11: #{seqmodel_forward.1} parent=1 // pred_check_branch
      %21 = sbr.rel (0) target = $region13
    $region12: #{seqmodel_forward.1} parent=1 // pred_region
      _
    $region13: #{seqmodel_forward.1} parent=1 // pred_fallthru
      _
    // Predicated region
    $region14: #{seqmodel_forward.1} parent=1 // pred_check
      _
    $region15: #{seqmodel_forward.1} parent=1 // pred_check_branch
      %23 = sbr.rel (0) target = $region17
    $region16: #{seqmodel_forward.1} parent=1 // pred_region
      _
    $region17: #{seqmodel_forward.1} parent=1 // pred_fallthru
      _
    // Predicated region
    $region18: #{seqmodel_forward.1} parent=1 // pred_check
      _
    $region19: #{seqmodel_forward.1} parent=1 // pred_check_branch
      %25 = sbr.rel (0) target = $region21
    $region20: #{seqmodel_forward.1} parent=1 // pred_region
      %s27 = ssub.s32 6144, 6144
      %28 = vsyncadd [#allocation3], %s27
      %s29 = sshll.u32 [#allocation2], 4
      %s30 = int_to_ptr.vmem [resolvable:$true] %s29
      %35 = dma.hbm_to_vmem [thread:$0]  %s4, 6144, %s30, [#allocation3], 128, 128, 8
    $region21: #{seqmodel_forward.1} parent=1 // pred_fallthru
      _
    // Predicated region
    $region22: #{seqmodel_forward.1} parent=1 // pred_check
      _
    $region23: #{seqmodel_forward.1} parent=1 // pred_check_branch
      %37 = sbr.rel (0) target = $region25
    $region24: #{seqmodel_forward.1} parent=1 // pred_region
      _
    $region25: #{seqmodel_forward.1} parent=1 // pred_fallthru
      _
    // Predicated region
    $region26: #{seqmodel_forward.1} parent=1 // pred_check
      _
    $region27: #{seqmodel_forward.1} parent=1 // pred_check_branch
      %39 = sbr.rel (0) target = $region29
    $region28: #{seqmodel_forward.1} parent=1 // pred_region
      _
    $region29: #{seqmodel_forward.1} parent=1 // pred_fallthru
      _
    // Predicated region
    $region30: #{seqmodel_forward.1} parent=1 // pred_check
      _
    $region31: #{seqmodel_forward.1} parent=1 // pred_check_branch
      %41 = sbr.rel (0) target = $region33
    $region32: #{seqmodel_forward.1} parent=1 // pred_region
      _
    $region33: #{seqmodel_forward.1} parent=1 // pred_fallthru
      _
    // Predicated region
    $region34: #{seqmodel_forward.1} parent=1 // pred_check
      _
    $region35: #{seqmodel_forward.1} parent=1 // pred_check_branch
      %43 = sbr.rel (0) target = $region37
    $region36: #{seqmodel_forward.1} parent=1 // pred_region
      _
    $region37: #{seqmodel_forward.1} parent=1 // pred_fallthru
      _
    // Predicated region
    $region38: #{seqmodel_forward.1} parent=1 // pred_check
      _
    $region39: #{seqmodel_forward.1} parent=1 // pred_check_branch
      %45 = sbr.rel (0) target = $region41
    $region40: #{seqmodel_forward.1} parent=1 // pred_region
      _
    $region41: #{seqmodel_forward.1} parent=1 // pred_fallthru
      _
    // Predicated region
    $region42: #{seqmodel_forward.1} parent=1 // pred_check
      _
    $region43: #{seqmodel_forward.1} parent=1 // pred_check_branch
      %47 = sbr.rel (0) target = $region45
    $region44: #{seqmodel_forward.1} parent=1 // pred_region
      %48 = dma.done [#allocation3], 6144
    $region45: #{seqmodel_forward.1} parent=1 // pred_fallthru
      _
    %v49 = vld [vmem:[%s0] sm:$0xff]
    %v50 = vld [vmem:[%s0 + $0x8] sm:$0xff]
    %v51 = vlaneseq
    %v52 = vand.u32 %v51, 127
    %53 = vset.pattern.permute.xlu0 0
    %54 = vperm.xlu0 %53, %v49
    %v55 = vpop.permute.xlu0 %54
    %56 = vset.pattern.permute.xlu0 0
    %57 = vperm.xlu0 %56, %v50
    %v58 = vpop.permute.xlu0 %57
    %vm59 = vcmp.eq.s32.totalorder %v52, %v55
    %vm60 = vcmp.eq.s32.totalorder %v52, %v58
    %v61 = vadd.s32 %v49, 50
    %v62 = vadd.s32 %v50, 50
    %63 = vset.pattern.permute.xlu0 1
    %64 = vperm.xlu0 %63, %v61
    %v65 = vpop.permute.xlu0 %64
    %66 = vset.pattern.permute.xlu0 1
    %67 = vperm.xlu0 %66, %v62
    %v68 = vpop.permute.xlu0 %67
    %vm69 = vcmp.eq.s32.totalorder %v52, %v65
    %vm70 = vcmp.eq.s32.totalorder %v52, %v68
    %vm71 = vmor %vm59, %vm69
    %vm72 = vmor %vm60, %vm70
    %v73 = vsel %vm71, 1, 0
    %v74 = vsel %vm72, 1, 0
    %v75 = vcvt.s32.f32 %v73
    %v76 = vcvt.s32.f32 %v74
    %v77 = vld [vmem:[%s1] sm:$0xff]
    %v78 = vld [vmem:[%s1 + $0x8] sm:$0xff]
    %v79 = vld [vmem:[%s1 + $0x10] sm:$0xff]
    %v80 = vld [vmem:[%s1 + $0x18] sm:$0xff]
    %v81 = vld [vmem:[%s1 + $0x20] sm:$0xff]
    %v82 = vld [vmem:[%s1 + $0x28] sm:$0xff]
    %v83 = vld [vmem:[%s1 + $0x30] sm:$0xff]
    %v84 = vld [vmem:[%s1 + $0x38] sm:$0xf]
    %vm85 = vcmask 490496
    %v87 = vsel %vm85, %v75, 0
    %v90 = vsel %vm85, %v76, 0
    %vm92 = vcmask 1043456
    %v94 = vsel %vm92, %v84, 0
    %96 = vmatprep.subr.mxu0 0.0
    %97 = vmatpush1.msra.mxu0 %v77
    %98 = vmatprep.subr.mxu0 0.0
    %99 = vmatpush1.msra.mxu0 %v78
    %100 = vmatprep.subr.mxu0 0.0
    %101 = vmatpush1.msra.mxu0 %v79
    %102 = vmatprep.subr.mxu0 0.0
    %103 = vmatpush1.msra.mxu0 %v80
    %104 = vmatprep.subr.mxu0 0.0
    %105 = vmatpush1.msra.mxu0 %v81
    %106 = vmatprep.subr.mxu0 0.0
    %107 = vmatpush1.msra.mxu0 %v82
    %108 = vmatprep.subr.mxu0 0.0
    %109 = vmatpush1.msra.mxu0 %v83
    %110 = vmatprep.subr.mxu0 0.0
    %111 = vmatpush1.msra.mxu0 %v94
    %112 = vmatprep.subr.mxu0 0.0
    %113 = vmatpush1.msra.mxu0 0.0
    %114 = vmatprep.subr.mxu0 0.0
    %115 = vmatpush1.msra.mxu0 0.0
    %116 = vmatprep.subr.mxu0 0.0
    %117 = vmatpush1.msra.mxu0 0.0
    %118 = vmatprep.subr.mxu0 0.0
    %119 = vmatpush1.msra.mxu0 0.0
    %120 = vmatprep.subr.mxu0 0.0
    %121 = vmatpush1.msra.mxu0 0.0
    %122 = vmatprep.subr.mxu0 0.0
    %123 = vmatpush1.msra.mxu0 0.0
    %124 = vmatprep.subr.mxu0 0.0
    %125 = vmatpush1.msra.mxu0 0.0
    %126 = vmatprep.subr.mxu0 0.0
    %127 = vmatpush1.msra.mxu0 0.0
    %128 = vmatprep.subr.mxu0 0.0
    %129 = vmatpush1.msra.mxu0 0.0
    %130 = vmatprep.subr.mxu0 0.0
    %131 = vmatpush1.msra.mxu0 0.0
    %132 = vmatprep.subr.mxu0 0.0
    %133 = vmatpush1.msra.mxu0 0.0
    %134 = vmatprep.subr.mxu0 0.0
    %135 = vmatpush1.msra.mxu0 0.0
    %136 = vmatprep.subr.mxu0 0.0
    %137 = vmatpush1.msra.mxu0 0.0
    %138 = vmatprep.subr.mxu0 0.0
    %139 = vmatpush1.msra.mxu0 0.0
    %140 = vmatprep.subr.mxu0 0.0
    %141 = vmatpush1.msra.mxu0 0.0
    %142 = vmatprep.subr.mxu0 0.0
    %143 = vmatpush1.msra.mxu0 0.0
    %144 = vmatprep.subr.mxu0 0.0
    %145 = vmatpush1.msra.mxu0 0.0
    %146 = vmatprep.subr.mxu0 0.0
    %147 = vmatpush1.msra.mxu0 0.0
    %148 = vmatprep.subr.mxu0 0.0
    %149 = vmatpush1.msra.mxu0 0.0
    %150 = vmatprep.subr.mxu0 0.0
    %151 = vmatpush1.msra.mxu0 0.0
    %152 = vmatprep.subr.mxu0 0.0
    %153 = vmatpush1.msra.mxu0 0.0
    %154 = vmatprep.subr.mxu0 0.0
    %155 = vmatpush1.msra.mxu0 0.0
    %156 = vmatprep.subr.mxu0 0.0
    %157 = vmatpush1.msra.mxu0 0.0
    %158 = vmatprep.subr.mxu0 0.0
    %159 = vmatpush1.msra.mxu0 0.0
    %160 = vmatprep.mubr.f32.mxu0 0.0
    %161 = vmatmul.mubr.f32.gmra.mrb[0].mxu0 %v87
    %v162 = vpop.f32.mrb[0].mxu0
    %v163 = vadd.f32 0.0, %v162
    %v164 = vpop.f32.mrb[0].mxu0
    %165 = vmatprep.mubr.f32.mxu0 0.0
    %166 = vmatmul.mubr.f32.gmra.mrb[0].mxu0 %v90
    %v167 = vpop.f32.mrb[0].mxu0
    %v168 = vadd.f32 0.0, %v167
    %v169 = vpop.f32.mrb[0].mxu0
    %170 = vdwg.mxu0
    %v171 = vld [vmem:[%s2] sm:$0xff]
    %v172 = vld [vmem:[%s2 + $0x8] sm:$0xff]
    %v173 = vld [vmem:[%s2 + $0x10] sm:$0xff]
    %v174 = vld [vmem:[%s2 + $0x18] sm:$0xff]
    %v175 = vld [vmem:[%s2 + $0x20] sm:$0xff]
    %v176 = vld [vmem:[%s3] sm:$0x1]
    %v178 = vlaneseq
    %v179 = vshrl.u32 %v178, 7
    %v180 = vsub.s32 0, %v179
    %v181 = vrot.slane %v176, %v180
    %vm183 = vcmask 326656
    %v185 = vsel %vm183, %v163, 0
    %v188 = vsel %vm183, %v168, 0
    %190 = vmatprep.subr.mxu0 0.0
    %191 = vmatpush1.msra.mxu0 %v171
    %192 = vmatprep.subr.mxu0 0.0
    %193 = vmatpush1.msra.mxu0 %v172
    %194 = vmatprep.subr.mxu0 0.0
    %195 = vmatpush1.msra.mxu0 %v173
    %196 = vmatprep.subr.mxu0 0.0
    %197 = vmatpush1.msra.mxu0 %v174
    %198 = vmatprep.subr.mxu0 0.0
    %199 = vmatpush1.msra.mxu0 %v175
    %200 = vmatprep.subr.mxu0 0.0
    %201 = vmatpush1.msra.mxu0 0.0
    %202 = vmatprep.subr.mxu0 0.0
    %203 = vmatpush1.msra.mxu0 0.0
    %204 = vmatprep.subr.mxu0 0.0
    %205 = vmatpush1.msra.mxu0 0.0
    %206 = vmatprep.subr.mxu0 0.0
    %207 = vmatpush1.msra.mxu0 0.0
    %208 = vmatprep.subr.mxu0 0.0
    %209 = vmatpush1.msra.mxu0 0.0
    %210 = vmatprep.subr.mxu0 0.0
    %211 = vmatpush1.msra.mxu0 0.0
    %212 = vmatprep.subr.mxu0 0.0
    %213 = vmatpush1.msra.mxu0 0.0
    %214 = vmatprep.subr.mxu0 0.0
    %215 = vmatpush1.msra.mxu0 0.0
    %216 = vmatprep.subr.mxu0 0.0
    %217 = vmatpush1.msra.mxu0 0.0
    %218 = vmatprep.subr.mxu0 0.0
    %219 = vmatpush1.msra.mxu0 0.0
    %220 = vmatprep.subr.mxu0 0.0
    %221 = vmatpush1.msra.mxu0 0.0
    %222 = vmatprep.subr.mxu0 0.0
    %223 = vmatpush1.msra.mxu0 0.0
    %224 = vmatprep.subr.mxu0 0.0
    %225 = vmatpush1.msra.mxu0 0.0
    %226 = vmatprep.subr.mxu0 0.0
    %227 = vmatpush1.msra.mxu0 0.0
    %228 = vmatprep.subr.mxu0 0.0
    %229 = vmatpush1.msra.mxu0 0.0
    %230 = vmatprep.subr.mxu0 0.0
    %231 = vmatpush1.msra.mxu0 0.0
    %232 = vmatprep.subr.mxu0 0.0
    %233 = vmatpush1.msra.mxu0 0.0
    %234 = vmatprep.subr.mxu0 0.0
    %235 = vmatpush1.msra.mxu0 0.0
    %236 = vmatprep.subr.mxu0 0.0
    %237 = vmatpush1.msra.mxu0 0.0
    %238 = vmatprep.subr.mxu0 0.0
    %239 = vmatpush1.msra.mxu0 0.0
    %240 = vmatprep.subr.mxu0 0.0
    %241 = vmatpush1.msra.mxu0 0.0
    %242 = vmatprep.subr.mxu0 0.0
    %243 = vmatpush1.msra.mxu0 0.0
    %244 = vmatprep.subr.mxu0 0.0
    %245 = vmatpush1.msra.mxu0 0.0
    %246 = vmatprep.subr.mxu0 0.0
    %247 = vmatpush1.msra.mxu0 0.0
    %248 = vmatprep.subr.mxu0 0.0
    %249 = vmatpush1.msra.mxu0 0.0
    %250 = vmatprep.subr.mxu0 0.0
    %251 = vmatpush1.msra.mxu0 0.0
    %252 = vmatprep.subr.mxu0 0.0
    %253 = vmatpush1.msra.mxu0 0.0
    %254 = vmatprep.mubr.f32.mxu0 0.0
    %255 = vmatmul.mubr.f32.gmra.mrb[0].mxu0 %v185
    %v256 = vpop.f32.mrb[0].mxu0
    %v257 = vadd.f32 %v181, %v256
    %v258 = vpop.f32.mrb[0].mxu0
    %259 = vmatprep.mubr.f32.mxu0 0.0
    %260 = vmatmul.mubr.f32.gmra.mrb[0].mxu0 %v188
    %v261 = vpop.f32.mrb[0].mxu0
    %v262 = vadd.f32 %v181, %v261
    %v263 = vpop.f32.mrb[0].mxu0
    %264 = vdwg.mxu0
    %v265 = vtanh.pop %v257
    %v266 = vtanh.pop %v262
    %v267 = vlaneseq
    %v268 = vshrl.u32 %v267, 7
    %v269 = vadd.s32 %v268, 8
    %vm270 = vcmp.lt.s32.totalorder %v268, 0
    %v271 = vsub.s32 0, %v268
    %v272 = vsel %vm270, %v271, %v268
    %v273 = vshrl.u32 %v272, 3
    %v274 = vand.u32 %v272, 7
    %v275 = vsub.s32 0, %v274
    %v276 = vsel %vm270, %v275, %v274
    %vm277 = vcmp.lt.s32.totalorder %v269, 0
    %v278 = vsub.s32 0, %v269
    %v279 = vsel %vm277, %v278, %v269
    %v280 = vshrl.u32 %v279, 3
    %v281 = vand.u32 %v279, 7
    %v282 = vsub.s32 0, %v281
    %v283 = vsel %vm277, %v282, %v281
    %vm284 = vcmp.ne.s32.totalorder %v276, 0
    %vm285 = vcmp.ne.s32.totalorder %v283, 0
    %vm286 = vcmp.lt.s32.totalorder %v276, 0
    %vm287 = vcmp.lt.s32.totalorder %v283, 0
    %vm288 = vmand %vm286, %vm284
    %vm289 = vmand %vm287, %vm285
    %v290 = vadd.s32 %v276, 8
    %v291 = vadd.s32 %v283, 8
    %v292 = vsel %vm288, %v290, %v276
    %v293 = vsel %vm289, %v291, %v283
    %vm294 = vcmp.gt.s32.totalorder %v292, 0
    %vm295 = vcmp.gt.s32.totalorder %v293, 0
    %v296 = vsel %vm294, 1, 0
    %v297 = vsel %vm295, 1, 0
    %v298 = vcvt.s32.f32 %v296
    %v299 = vcvt.s32.f32 %v297
    %vm300 = vcmp.lt.s32.totalorder %v292, 7
    %vm301 = vcmp.lt.s32.totalorder %v293, 7
    %v302 = vsel %vm300, 1, 0
    %v303 = vsel %vm301, 1, 0
    %v304 = vcvt.s32.f32 %v302
    %v305 = vcvt.s32.f32 %v303
    %v306 = vrot.slane %v265, 7
    %v307 = vrot.slane %v266, 7
    %vm308 = vcmp.lt.s32.totalorder %v268, 1
    %v309 = vsel %vm308, %v306, %v307
    %v310 = vsel %vm308, %v307, %v306
    %v311 = vmul.f32 %v310, %v298
    %v312 = vmul.f32 %v309, %v299
    %v313 = vrot.slane %v265, 1
    %v314 = vrot.slane %v266, 1
    %vm315 = vcmp.lt.s32.totalorder %v268, 7
    %v316 = vsel %vm315, %v313, %v314
    %v317 = vsel %vm315, %v314, %v313
    %v318 = vmul.f32 %v316, %v304
    %v319 = vmul.f32 %v317, %v305
    %v320 = vld [vmem:[#allocation2] sm:$0xff]
    %v321 = vld [vmem:[#allocation2 + $0x8] sm:$0xff]
    %v322 = vld [vmem:[#allocation2 + $0x10] sm:$0xff]
    %v323 = vld [vmem:[#allocation2 + $0x18] sm:$0xff]
    %v324 = vld [vmem:[#allocation2 + $0x20] sm:$0xff]
    %v325 = vld [vmem:[#allocation2 + $0x28] sm:$0xff]
    %v326 = vld [vmem:[#allocation2 + $0x30] sm:$0xff]
    %v327 = vld [vmem:[#allocation2 + $0x38] sm:$0xff]
    %s328 = scalar_lea.vmem [#allocation2], 64
    %v329 = vld [vmem:[%s328] sm:$0xff]
    %v330 = vld [vmem:[%s328 + $0x8] sm:$0xff]
    %v331 = vld [vmem:[%s328 + $0x10] sm:$0xff]
    %v332 = vld [vmem:[%s328 + $0x18] sm:$0xff]
    %v333 = vld [vmem:[%s328 + $0x20] sm:$0xff]
    %v334 = vld [vmem:[%s328 + $0x28] sm:$0xff]
    %v335 = vld [vmem:[%s328 + $0x30] sm:$0xff]
    %v336 = vld [vmem:[%s328 + $0x38] sm:$0xff]
    %vm337 = vcmask 523264
    %v339 = vsel %vm337, %v265, 0
    %v342 = vsel %vm337, %v266, 0
    %344 = vmatprep.subr.mxu0 0.0
    %345 = vmatpush1.msra.mxu0 %v329
    %346 = vmatprep.subr.mxu0 0.0
    %347 = vmatpush1.msra.mxu0 %v330
    %348 = vmatprep.subr.mxu0 0.0
    %349 = vmatpush1.msra.mxu0 %v331
    %350 = vmatprep.subr.mxu0 0.0
    %351 = vmatpush1.msra.mxu0 %v332
    %352 = vmatprep.subr.mxu0 0.0
    %353 = vmatpush1.msra.mxu0 %v333
    %354 = vmatprep.subr.mxu0 0.0
    %355 = vmatpush1.msra.mxu0 %v334
    %356 = vmatprep.subr.mxu0 0.0
    %357 = vmatpush1.msra.mxu0 %v335
    %358 = vmatprep.subr.mxu0 0.0
    %359 = vmatpush1.msra.mxu0 %v336
    %360 = vmatprep.subr.mxu0 0.0
    %361 = vmatpush1.msra.mxu0 0.0
    %362 = vmatprep.subr.mxu0 0.0
    %363 = vmatpush1.msra.mxu0 0.0
    %364 = vmatprep.subr.mxu0 0.0
    %365 = vmatpush1.msra.mxu0 0.0
    %366 = vmatprep.subr.mxu0 0.0
    %367 = vmatpush1.msra.mxu0 0.0
    %368 = vmatprep.subr.mxu0 0.0
    %369 = vmatpush1.msra.mxu0 0.0
    %370 = vmatprep.subr.mxu0 0.0
    %371 = vmatpush1.msra.mxu0 0.0
    %372 = vmatprep.subr.mxu0 0.0
    %373 = vmatpush1.msra.mxu0 0.0
    %374 = vmatprep.subr.mxu0 0.0
    %375 = vmatpush1.msra.mxu0 0.0
    %376 = vmatprep.subr.mxu0 0.0
    %377 = vmatpush1.msra.mxu0 0.0
    %378 = vmatprep.subr.mxu0 0.0
    %379 = vmatpush1.msra.mxu0 0.0
    %380 = vmatprep.subr.mxu0 0.0
    %381 = vmatpush1.msra.mxu0 0.0
    %382 = vmatprep.subr.mxu0 0.0
    %383 = vmatpush1.msra.mxu0 0.0
    %384 = vmatprep.subr.mxu0 0.0
    %385 = vmatpush1.msra.mxu0 0.0
    %386 = vmatprep.subr.mxu0 0.0
    %387 = vmatpush1.msra.mxu0 0.0
    %388 = vmatprep.subr.mxu0 0.0
    %389 = vmatpush1.msra.mxu0 0.0
    %390 = vmatprep.subr.mxu0 0.0
    %391 = vmatpush1.msra.mxu0 0.0
    %392 = vmatprep.subr.mxu0 0.0
    %393 = vmatpush1.msra.mxu0 0.0
    %394 = vmatprep.subr.mxu0 0.0
    %395 = vmatpush1.msra.mxu0 0.0
    %396 = vmatprep.subr.mxu0 0.0
    %397 = vmatpush1.msra.mxu0 0.0
    %398 = vmatprep.subr.mxu0 0.0
    %399 = vmatpush1.msra.mxu0 0.0
    %400 = vmatprep.subr.mxu0 0.0
    %401 = vmatpush1.msra.mxu0 0.0
    %402 = vmatprep.subr.mxu0 0.0
    %403 = vmatpush1.msra.mxu0 0.0
    %404 = vmatprep.subr.mxu0 0.0
    %405 = vmatpush1.msra.mxu0 0.0
    %406 = vmatprep.subr.mxu0 0.0
    %407 = vmatpush1.msra.mxu0 0.0
    %408 = vmatprep.mubr.f32.mxu0 0.0
    %409 = vmatmul.mubr.f32.gmra.mrb[0].mxu0 %v339
    %v410 = vpop.f32.mrb[0].mxu0
    %v411 = vadd.f32 0.0, %v410
    %v412 = vpop.f32.mrb[0].mxu0
    %413 = vmatprep.mubr.f32.mxu0 0.0
    %414 = vmatmul.mubr.f32.gmra.mrb[0].mxu0 %v342
    %v415 = vpop.f32.mrb[0].mxu0
    %v416 = vadd.f32 0.0, %v415
    %v417 = vpop.f32.mrb[0].mxu0
    %418 = vdwg.mxu0
    %v420 = vsel %vm337, %v311, 0
    %v423 = vsel %vm337, %v312, 0
    %425 = vmatprep.subr.mxu0 0.0
    %426 = vmatpush1.msra.mxu0 %v320
    %427 = vmatprep.subr.mxu0 0.0
    %428 = vmatpush1.msra.mxu0 %v321
    %429 = vmatprep.subr.mxu0 0.0
    %430 = vmatpush1.msra.mxu0 %v322
    %431 = vmatprep.subr.mxu0 0.0
    %432 = vmatpush1.msra.mxu0 %v323
    %433 = vmatprep.subr.mxu0 0.0
    %434 = vmatpush1.msra.mxu0 %v324
    %435 = vmatprep.subr.mxu0 0.0
    %436 = vmatpush1.msra.mxu0 %v325
    %437 = vmatprep.subr.mxu0 0.0
    %438 = vmatpush1.msra.mxu0 %v326
    %439 = vmatprep.subr.mxu0 0.0
    %440 = vmatpush1.msra.mxu0 %v327
    %441 = vmatprep.subr.mxu0 0.0
    %442 = vmatpush1.msra.mxu0 0.0
    %443 = vmatprep.subr.mxu0 0.0
    %444 = vmatpush1.msra.mxu0 0.0
    %445 = vmatprep.subr.mxu0 0.0
    %446 = vmatpush1.msra.mxu0 0.0
    %447 = vmatprep.subr.mxu0 0.0
    %448 = vmatpush1.msra.mxu0 0.0
    %449 = vmatprep.subr.mxu0 0.0
    %450 = vmatpush1.msra.mxu0 0.0
    %451 = vmatprep.subr.mxu0 0.0
    %452 = vmatpush1.msra.mxu0 0.0
    %453 = vmatprep.subr.mxu0 0.0
    %454 = vmatpush1.msra.mxu0 0.0
    %455 = vmatprep.subr.mxu0 0.0
    %456 = vmatpush1.msra.mxu0 0.0
    %457 = vmatprep.subr.mxu0 0.0
    %458 = vmatpush1.msra.mxu0 0.0
    %459 = vmatprep.subr.mxu0 0.0
    %460 = vmatpush1.msra.mxu0 0.0
    %461 = vmatprep.subr.mxu0 0.0
    %462 = vmatpush1.msra.mxu0 0.0
    %463 = vmatprep.subr.mxu0 0.0
    %464 = vmatpush1.msra.mxu0 0.0
    %465 = vmatprep.subr.mxu0 0.0
    %466 = vmatpush1.msra.mxu0 0.0
    %467 = vmatprep.subr.mxu0 0.0
    %468 = vmatpush1.msra.mxu0 0.0
    %469 = vmatprep.subr.mxu0 0.0
    %470 = vmatpush1.msra.mxu0 0.0
    %471 = vmatprep.subr.mxu0 0.0
    %472 = vmatpush1.msra.mxu0 0.0
    %473 = vmatprep.subr.mxu0 0.0
    %474 = vmatpush1.msra.mxu0 0.0
    %475 = vmatprep.subr.mxu0 0.0
    %476 = vmatpush1.msra.mxu0 0.0
    %477 = vmatprep.subr.mxu0 0.0
    %478 = vmatpush1.msra.mxu0 0.0
    %479 = vmatprep.subr.mxu0 0.0
    %480 = vmatpush1.msra.mxu0 0.0
    %481 = vmatprep.subr.mxu0 0.0
    %482 = vmatpush1.msra.mxu0 0.0
    %483 = vmatprep.subr.mxu0 0.0
    %484 = vmatpush1.msra.mxu0 0.0
    %485 = vmatprep.subr.mxu0 0.0
    %486 = vmatpush1.msra.mxu0 0.0
    %487 = vmatprep.subr.mxu0 0.0
    %488 = vmatpush1.msra.mxu0 0.0
    %489 = vmatprep.mubr.f32.mxu0 0.0
    %490 = vmatmul.mubr.f32.gmra.mrb[0].mxu0 %v420
    %v491 = vpop.f32.mrb[0].mxu0
    %v492 = vadd.f32 %v411, %v491
    %v493 = vpop.f32.mrb[0].mxu0
    %494 = vmatprep.mubr.f32.mxu0 0.0
    %495 = vmatmul.mubr.f32.gmra.mrb[0].mxu0 %v423
    %v496 = vpop.f32.mrb[0].mxu0
    %v497 = vadd.f32 %v416, %v496
    %v498 = vpop.f32.mrb[0].mxu0
    %499 = vdwg.mxu0
    %s500 = scalar_lea.vmem [#allocation2], 128
    %v501 = vld [vmem:[%s500] sm:$0xff]
    %v502 = vld [vmem:[%s500 + $0x8] sm:$0xff]
    %v503 = vld [vmem:[%s500 + $0x10] sm:$0xff]
    %v504 = vld [vmem:[%s500 + $0x18] sm:$0xff]
    %v505 = vld [vmem:[%s500 + $0x20] sm:$0xff]
    %v506 = vld [vmem:[%s500 + $0x28] sm:$0xff]
    %v507 = vld [vmem:[%s500 + $0x30] sm:$0xff]
    %v508 = vld [vmem:[%s500 + $0x38] sm:$0xff]
    %v510 = vsel %vm337, %v318, 0
    %v513 = vsel %vm337, %v319, 0
    %515 = vmatprep.subr.mxu0 0.0
    %516 = vmatpush1.msra.mxu0 %v501
    %517 = vmatprep.subr.mxu0 0.0
    %518 = vmatpush1.msra.mxu0 %v502
    %519 = vmatprep.subr.mxu0 0.0
    %520 = vmatpush1.msra.mxu0 %v503
    %521 = vmatprep.subr.mxu0 0.0
    %522 = vmatpush1.msra.mxu0 %v504
    %523 = vmatprep.subr.mxu0 0.0
    %524 = vmatpush1.msra.mxu0 %v505
    %525 = vmatprep.subr.mxu0 0.0
    %526 = vmatpush1.msra.mxu0 %v506
    %527 = vmatprep.subr.mxu0 0.0
    %528 = vmatpush1.msra.mxu0 %v507
    %529 = vmatprep.subr.mxu0 0.0
    %530 = vmatpush1.msra.mxu0 %v508
    %531 = vmatprep.subr.mxu0 0.0
    %532 = vmatpush1.msra.mxu0 0.0
    %533 = vmatprep.subr.mxu0 0.0
    %534 = vmatpush1.msra.mxu0 0.0
    %535 = vmatprep.subr.mxu0 0.0
    %536 = vmatpush1.msra.mxu0 0.0
    %537 = vmatprep.subr.mxu0 0.0
    %538 = vmatpush1.msra.mxu0 0.0
    %539 = vmatprep.subr.mxu0 0.0
    %540 = vmatpush1.msra.mxu0 0.0
    %541 = vmatprep.subr.mxu0 0.0
    %542 = vmatpush1.msra.mxu0 0.0
    %543 = vmatprep.subr.mxu0 0.0
    %544 = vmatpush1.msra.mxu0 0.0
    %545 = vmatprep.subr.mxu0 0.0
    %546 = vmatpush1.msra.mxu0 0.0
    %547 = vmatprep.subr.mxu0 0.0
    %548 = vmatpush1.msra.mxu0 0.0
    %549 = vmatprep.subr.mxu0 0.0
    %550 = vmatpush1.msra.mxu0 0.0
    %551 = vmatprep.subr.mxu0 0.0
    %552 = vmatpush1.msra.mxu0 0.0
    %553 = vmatprep.subr.mxu0 0.0
    %554 = vmatpush1.msra.mxu0 0.0
    %555 = vmatprep.subr.mxu0 0.0
    %556 = vmatpush1.msra.mxu0 0.0
    %557 = vmatprep.subr.mxu0 0.0
    %558 = vmatpush1.msra.mxu0 0.0
    %559 = vmatprep.subr.mxu0 0.0
    %560 = vmatpush1.msra.mxu0 0.0
    %561 = vmatprep.subr.mxu0 0.0
    %562 = vmatpush1.msra.mxu0 0.0
    %563 = vmatprep.subr.mxu0 0.0
    %564 = vmatpush1.msra.mxu0 0.0
    %565 = vmatprep.subr.mxu0 0.0
    %566 = vmatpush1.msra.mxu0 0.0
    %567 = vmatprep.subr.mxu0 0.0
    %568 = vmatpush1.msra.mxu0 0.0
    %569 = vmatprep.subr.mxu0 0.0
    %570 = vmatpush1.msra.mxu0 0.0
    %571 = vmatprep.subr.mxu0 0.0
    %572 = vmatpush1.msra.mxu0 0.0
    %573 = vmatprep.subr.mxu0 0.0
    %574 = vmatpush1.msra.mxu0 0.0
    %575 = vmatprep.subr.mxu0 0.0
    %576 = vmatpush1.msra.mxu0 0.0
    %577 = vmatprep.subr.mxu0 0.0
    %578 = vmatpush1.msra.mxu0 0.0
    %579 = vmatprep.mubr.f32.mxu0 0.0
    %580 = vmatmul.mubr.f32.gmra.mrb[0].mxu0 %v510
    %v581 = vpop.f32.mrb[0].mxu0
    %v582 = vadd.f32 0.0, %v581
    %v583 = vpop.f32.mrb[0].mxu0
    %584 = vmatprep.mubr.f32.mxu0 0.0
    %585 = vmatmul.mubr.f32.gmra.mrb[0].mxu0 %v513
    %v586 = vpop.f32.mrb[0].mxu0
    %v587 = vadd.f32 0.0, %v586
    %v588 = vpop.f32.mrb[0].mxu0
    %589 = vdwg.mxu0
    %v590 = vadd.f32 %v492, %v582
    %v591 = vadd.f32 %v497, %v587
    %v592 = vld [vmem:[%s5] sm:$0x1]
    %v594 = vlaneseq
    %v595 = vshrl.u32 %v594, 7
    %v596 = vsub.s32 0, %v595
    %v597 = vrot.slane %v592, %v596
    %v599 = vadd.f32 %v590, %v597
    %v600 = vadd.f32 %v591, %v597
    %v601 = vmax.f32 %v599, 0.0
    %v602 = vmax.f32 %v600, 0.0
    %v603 = vld [vmem:[%s6] sm:$0x1]
    %v605 = vlaneseq
    %v606 = vshrl.u32 %v605, 7
    %v607 = vsub.s32 0, %v606
    %v608 = vrot.slane %v603, %v607
    %v610 = vmul.f32 %v601, %v608
    %v611 = vmul.f32 %v602, %v608
    %v612 = vld [vmem:[%s7] sm:$0x1]
    %v614 = vlaneseq
    %v615 = vshrl.u32 %v614, 7
    %v616 = vsub.s32 0, %v615
    %v617 = vrot.slane %v612, %v616
    %v619 = vadd.f32 %v610, %v617
    %v620 = vadd.f32 %v611, %v617
    %v621 = vrot.slane %v619, 7
    %v622 = vrot.slane %v620, 7
    %v623 = vsel %vm308, %v621, %v622
    %v624 = vsel %vm308, %v622, %v621
    %v625 = vmul.f32 %v624, %v298
    %v626 = vmul.f32 %v623, %v299
    %v627 = vrot.slane %v619, 1
    %v628 = vrot.slane %v620, 1
    %v629 = vsel %vm315, %v627, %v628
    %v630 = vsel %vm315, %v628, %v627
    %v631 = vmul.f32 %v629, %v304
    %v632 = vmul.f32 %v630, %v305
    %s633 = scalar_lea.vmem [#allocation2], 192
    %v634 = vld [vmem:[%s633] sm:$0xff]
    %v635 = vld [vmem:[%s633 + $0x8] sm:$0xff]
    %v636 = vld [vmem:[%s633 + $0x10] sm:$0xff]
    %v637 = vld [vmem:[%s633 + $0x18] sm:$0xff]
    %v638 = vld [vmem:[%s633 + $0x20] sm:$0xff]
    %v639 = vld [vmem:[%s633 + $0x28] sm:$0xff]
    %v640 = vld [vmem:[%s633 + $0x30] sm:$0xff]
    %v641 = vld [vmem:[%s633 + $0x38] sm:$0xff]
    %s642 = scalar_lea.vmem [#allocation2], 256
    %v643 = vld [vmem:[%s642] sm:$0xff]
    %v644 = vld [vmem:[%s642 + $0x8] sm:$0xff]
    %v645 = vld [vmem:[%s642 + $0x10] sm:$0xff]
    %v646 = vld [vmem:[%s642 + $0x18] sm:$0xff]
    %v647 = vld [vmem:[%s642 + $0x20] sm:$0xff]
    %v648 = vld [vmem:[%s642 + $0x28] sm:$0xff]
    %v649 = vld [vmem:[%s642 + $0x30] sm:$0xff]
    %v650 = vld [vmem:[%s642 + $0x38] sm:$0xff]
    %v652 = vsel %vm337, %v619, 0
    %v655 = vsel %vm337, %v620, 0
    %657 = vmatprep.subr.mxu0 0.0
    %658 = vmatpush1.msra.mxu0 %v643
    %659 = vmatprep.subr.mxu0 0.0
    %660 = vmatpush1.msra.mxu0 %v644
    %661 = vmatprep.subr.mxu0 0.0
    %662 = vmatpush1.msra.mxu0 %v645
    %663 = vmatprep.subr.mxu0 0.0
    %664 = vmatpush1.msra.mxu0 %v646
    %665 = vmatprep.subr.mxu0 0.0
    %666 = vmatpush1.msra.mxu0 %v647
    %667 = vmatprep.subr.mxu0 0.0
    %668 = vmatpush1.msra.mxu0 %v648
    %669 = vmatprep.subr.mxu0 0.0
    %670 = vmatpush1.msra.mxu0 %v649
    %671 = vmatprep.subr.mxu0 0.0
    %672 = vmatpush1.msra.mxu0 %v650
    %673 = vmatprep.subr.mxu0 0.0
    %674 = vmatpush1.msra.mxu0 0.0
    %675 = vmatprep.subr.mxu0 0.0
    %676 = vmatpush1.msra.mxu0 0.0
    %677 = vmatprep.subr.mxu0 0.0
    %678 = vmatpush1.msra.mxu0 0.0
    %679 = vmatprep.subr.mxu0 0.0
    %680 = vmatpush1.msra.mxu0 0.0
    %681 = vmatprep.subr.mxu0 0.0
    %682 = vmatpush1.msra.mxu0 0.0
    %683 = vmatprep.subr.mxu0 0.0
    %684 = vmatpush1.msra.mxu0 0.0
    %685 = vmatprep.subr.mxu0 0.0
    %686 = vmatpush1.msra.mxu0 0.0
    %687 = vmatprep.subr.mxu0 0.0
    %688 = vmatpush1.msra.mxu0 0.0
    %689 = vmatprep.subr.mxu0 0.0
    %690 = vmatpush1.msra.mxu0 0.0
    %691 = vmatprep.subr.mxu0 0.0
    %692 = vmatpush1.msra.mxu0 0.0
    %693 = vmatprep.subr.mxu0 0.0
    %694 = vmatpush1.msra.mxu0 0.0
    %695 = vmatprep.subr.mxu0 0.0
    %696 = vmatpush1.msra.mxu0 0.0
    %697 = vmatprep.subr.mxu0 0.0
    %698 = vmatpush1.msra.mxu0 0.0
    %699 = vmatprep.subr.mxu0 0.0
    %700 = vmatpush1.msra.mxu0 0.0
    %701 = vmatprep.subr.mxu0 0.0
    %702 = vmatpush1.msra.mxu0 0.0
    %703 = vmatprep.subr.mxu0 0.0
    %704 = vmatpush1.msra.mxu0 0.0
    %705 = vmatprep.subr.mxu0 0.0
    %706 = vmatpush1.msra.mxu0 0.0
    %707 = vmatprep.subr.mxu0 0.0
    %708 = vmatpush1.msra.mxu0 0.0
    %709 = vmatprep.subr.mxu0 0.0
    %710 = vmatpush1.msra.mxu0 0.0
    %711 = vmatprep.subr.mxu0 0.0
    %712 = vmatpush1.msra.mxu0 0.0
    %713 = vmatprep.subr.mxu0 0.0
    %714 = vmatpush1.msra.mxu0 0.0
    %715 = vmatprep.subr.mxu0 0.0
    %716 = vmatpush1.msra.mxu0 0.0
    %717 = vmatprep.subr.mxu0 0.0
    %718 = vmatpush1.msra.mxu0 0.0
    %719 = vmatprep.subr.mxu0 0.0
    %720 = vmatpush1.msra.mxu0 0.0
    %721 = vmatprep.mubr.f32.mxu0 0.0
    %722 = vmatmul.mubr.f32.gmra.mrb[0].mxu0 %v652
    %v723 = vpop.f32.mrb[0].mxu0
    %v724 = vadd.f32 0.0, %v723
    %v725 = vpop.f32.mrb[0].mxu0
    %726 = vmatprep.mubr.f32.mxu0 0.0
    %727 = vmatmul.mubr.f32.gmra.mrb[0].mxu0 %v655
    %v728 = vpop.f32.mrb[0].mxu0
    %v729 = vadd.f32 0.0, %v728
    %v730 = vpop.f32.mrb[0].mxu0
    %731 = vdwg.mxu0
    %v733 = vsel %vm337, %v625, 0
    %v736 = vsel %vm337, %v626, 0
    %738 = vmatprep.subr.mxu0 0.0
    %739 = vmatpush1.msra.mxu0 %v634
    %740 = vmatprep.subr.mxu0 0.0
    %741 = vmatpush1.msra.mxu0 %v635
    %742 = vmatprep.subr.mxu0 0.0
    %743 = vmatpush1.msra.mxu0 %v636
    %744 = vmatprep.subr.mxu0 0.0
    %745 = vmatpush1.msra.mxu0 %v637
    %746 = vmatprep.subr.mxu0 0.0
    %747 = vmatpush1.msra.mxu0 %v638
    %748 = vmatprep.subr.mxu0 0.0
    %749 = vmatpush1.msra.mxu0 %v639
    %750 = vmatprep.subr.mxu0 0.0
    %751 = vmatpush1.msra.mxu0 %v640
    %752 = vmatprep.subr.mxu0 0.0
    %753 = vmatpush1.msra.mxu0 %v641
    %754 = vmatprep.subr.mxu0 0.0
    %755 = vmatpush1.msra.mxu0 0.0
    %756 = vmatprep.subr.mxu0 0.0
    %757 = vmatpush1.msra.mxu0 0.0
    %758 = vmatprep.subr.mxu0 0.0
    %759 = vmatpush1.msra.mxu0 0.0
    %760 = vmatprep.subr.mxu0 0.0
    %761 = vmatpush1.msra.mxu0 0.0
    %762 = vmatprep.subr.mxu0 0.0
    %763 = vmatpush1.msra.mxu0 0.0
    %764 = vmatprep.subr.mxu0 0.0
    %765 = vmatpush1.msra.mxu0 0.0
    %766 = vmatprep.subr.mxu0 0.0
    %767 = vmatpush1.msra.mxu0 0.0
    %768 = vmatprep.subr.mxu0 0.0
    %769 = vmatpush1.msra.mxu0 0.0
    %770 = vmatprep.subr.mxu0 0.0
    %771 = vmatpush1.msra.mxu0 0.0
    %772 = vmatprep.subr.mxu0 0.0
    %773 = vmatpush1.msra.mxu0 0.0
    %774 = vmatprep.subr.mxu0 0.0
    %775 = vmatpush1.msra.mxu0 0.0
    %776 = vmatprep.subr.mxu0 0.0
    %777 = vmatpush1.msra.mxu0 0.0
    %778 = vmatprep.subr.mxu0 0.0
    %779 = vmatpush1.msra.mxu0 0.0
    %780 = vmatprep.subr.mxu0 0.0
    %781 = vmatpush1.msra.mxu0 0.0
    %782 = vmatprep.subr.mxu0 0.0
    %783 = vmatpush1.msra.mxu0 0.0
    %784 = vmatprep.subr.mxu0 0.0
    %785 = vmatpush1.msra.mxu0 0.0
    %786 = vmatprep.subr.mxu0 0.0
    %787 = vmatpush1.msra.mxu0 0.0
    %788 = vmatprep.subr.mxu0 0.0
    %789 = vmatpush1.msra.mxu0 0.0
    %790 = vmatprep.subr.mxu0 0.0
    %791 = vmatpush1.msra.mxu0 0.0
    %792 = vmatprep.subr.mxu0 0.0
    %793 = vmatpush1.msra.mxu0 0.0
    %794 = vmatprep.subr.mxu0 0.0
    %795 = vmatpush1.msra.mxu0 0.0
    %796 = vmatprep.subr.mxu0 0.0
    %797 = vmatpush1.msra.mxu0 0.0
    %798 = vmatprep.subr.mxu0 0.0
    %799 = vmatpush1.msra.mxu0 0.0
    %800 = vmatprep.subr.mxu0 0.0
    %801 = vmatpush1.msra.mxu0 0.0
    %802 = vmatprep.mubr.f32.mxu0 0.0
    %803 = vmatmul.mubr.f32.gmra.mrb[0].mxu0 %v733
    %v804 = vpop.f32.mrb[0].mxu0
    %v805 = vadd.f32 %v724, %v804
    %v806 = vpop.f32.mrb[0].mxu0
    %807 = vmatprep.mubr.f32.mxu0 0.0
    %808 = vmatmul.mubr.f32.gmra.mrb[0].mxu0 %v736
    %v809 = vpop.f32.mrb[0].mxu0
    %v810 = vadd.f32 %v729, %v809
    %v811 = vpop.f32.mrb[0].mxu0
    %812 = vdwg.mxu0
    %s813 = scalar_lea.vmem [#allocation2], 320
    %v814 = vld [vmem:[%s813] sm:$0xff]
    %v815 = vld [vmem:[%s813 + $0x8] sm:$0xff]
    %v816 = vld [vmem:[%s813 + $0x10] sm:$0xff]
    %v817 = vld [vmem:[%s813 + $0x18] sm:$0xff]
    %v818 = vld [vmem:[%s813 + $0x20] sm:$0xff]
    %v819 = vld [vmem:[%s813 + $0x28] sm:$0xff]
    %v820 = vld [vmem:[%s813 + $0x30] sm:$0xff]
    %v821 = vld [vmem:[%s813 + $0x38] sm:$0xff]
    %v823 = vsel %vm337, %v631, 0
    %v826 = vsel %vm337, %v632, 0
    %828 = vmatprep.subr.mxu0 0.0
    %829 = vmatpush1.msra.mxu0 %v814
    %830 = vmatprep.subr.mxu0 0.0
    %831 = vmatpush1.msra.mxu0 %v815
    %832 = vmatprep.subr.mxu0 0.0
    %833 = vmatpush1.msra.mxu0 %v816
    %834 = vmatprep.subr.mxu0 0.0
    %835 = vmatpush1.msra.mxu0 %v817
    %836 = vmatprep.subr.mxu0 0.0
    %837 = vmatpush1.msra.mxu0 %v818
    %838 = vmatprep.subr.mxu0 0.0
    %839 = vmatpush1.msra.mxu0 %v819
    %840 = vmatprep.subr.mxu0 0.0
    %841 = vmatpush1.msra.mxu0 %v820
    %842 = vmatprep.subr.mxu0 0.0
    %843 = vmatpush1.msra.mxu0 %v821
    %844 = vmatprep.subr.mxu0 0.0
    %845 = vmatpush1.msra.mxu0 0.0
    %846 = vmatprep.subr.mxu0 0.0
    %847 = vmatpush1.msra.mxu0 0.0
    %848 = vmatprep.subr.mxu0 0.0
    %849 = vmatpush1.msra.mxu0 0.0
    %850 = vmatprep.subr.mxu0 0.0
    %851 = vmatpush1.msra.mxu0 0.0
    %852 = vmatprep.subr.mxu0 0.0
    %853 = vmatpush1.msra.mxu0 0.0
    %854 = vmatprep.subr.mxu0 0.0
    %855 = vmatpush1.msra.mxu0 0.0
    %856 = vmatprep.subr.mxu0 0.0
    %857 = vmatpush1.msra.mxu0 0.0
    %858 = vmatprep.subr.mxu0 0.0
    %859 = vmatpush1.msra.mxu0 0.0
    %860 = vmatprep.subr.mxu0 0.0
    %861 = vmatpush1.msra.mxu0 0.0
    %862 = vmatprep.subr.mxu0 0.0
    %863 = vmatpush1.msra.mxu0 0.0
    %864 = vmatprep.subr.mxu0 0.0
    %865 = vmatpush1.msra.mxu0 0.0
    %866 = vmatprep.subr.mxu0 0.0
    %867 = vmatpush1.msra.mxu0 0.0
    %868 = vmatprep.subr.mxu0 0.0
    %869 = vmatpush1.msra.mxu0 0.0
    %870 = vmatprep.subr.mxu0 0.0
    %871 = vmatpush1.msra.mxu0 0.0
    %872 = vmatprep.subr.mxu0 0.0
    %873 = vmatpush1.msra.mxu0 0.0
    %874 = vmatprep.subr.mxu0 0.0
    %875 = vmatpush1.msra.mxu0 0.0
    %876 = vmatprep.subr.mxu0 0.0
    %877 = vmatpush1.msra.mxu0 0.0
    %878 = vmatprep.subr.mxu0 0.0
    %879 = vmatpush1.msra.mxu0 0.0
    %880 = vmatprep.subr.mxu0 0.0
    %881 = vmatpush1.msra.mxu0 0.0
    %882 = vmatprep.subr.mxu0 0.0
    %883 = vmatpush1.msra.mxu0 0.0
    %884 = vmatprep.subr.mxu0 0.0
    %885 = vmatpush1.msra.mxu0 0.0
    %886 = vmatprep.subr.mxu0 0.0
    %887 = vmatpush1.msra.mxu0 0.0
    %888 = vmatprep.subr.mxu0 0.0
    %889 = vmatpush1.msra.mxu0 0.0
    %890 = vmatprep.subr.mxu0 0.0
    %891 = vmatpush1.msra.mxu0 0.0
    %892 = vmatprep.mubr.f32.mxu0 0.0
    %893 = vmatmul.mubr.f32.gmra.mrb[0].mxu0 %v823
    %v894 = vpop.f32.mrb[0].mxu0
    %v895 = vadd.f32 0.0, %v894
    %v896 = vpop.f32.mrb[0].mxu0
    %897 = vmatprep.mubr.f32.mxu0 0.0
    %898 = vmatmul.mubr.f32.gmra.mrb[0].mxu0 %v826
    %v899 = vpop.f32.mrb[0].mxu0
    %v900 = vadd.f32 0.0, %v899
    %v901 = vpop.f32.mrb[0].mxu0
    %902 = vdwg.mxu0
    %v903 = vadd.f32 %v805, %v895
    %v904 = vadd.f32 %v810, %v900
    %s905 = scalar_lea.vmem %s5, 1
    %v906 = vld [vmem:[%s905] sm:$0x1]
    %v908 = vlaneseq
    %v909 = vshrl.u32 %v908, 7
    %v910 = vsub.s32 0, %v909
    %v911 = vrot.slane %v906, %v910
    %v913 = vadd.f32 %v903, %v911
    %v914 = vadd.f32 %v904, %v911
    %v915 = vmax.f32 %v913, 0.0
    %v916 = vmax.f32 %v914, 0.0
    %s917 = scalar_lea.vmem %s6, 1
    %v918 = vld [vmem:[%s917] sm:$0x1]
    %v920 = vlaneseq
    %v921 = vshrl.u32 %v920, 7
    %v922 = vsub.s32 0, %v921
    %v923 = vrot.slane %v918, %v922
    %v925 = vmul.f32 %v915, %v923
    %v926 = vmul.f32 %v916, %v923
    %s927 = scalar_lea.vmem %s7, 1
    %v928 = vld [vmem:[%s927] sm:$0x1]
    %v930 = vlaneseq
    %v931 = vshrl.u32 %v930, 7
    %v932 = vsub.s32 0, %v931
    %v933 = vrot.slane %v928, %v932
    %v935 = vadd.f32 %v925, %v933
    %v936 = vadd.f32 %v926, %v933
    %v937 = vld [vmem:[%s8] sm:$0xff]
    %v938 = vld [vmem:[%s8 + $0x8] sm:$0xff]
    %v939 = vld [vmem:[%s8 + $0x10] sm:$0xff]
    %v940 = vld [vmem:[%s8 + $0x18] sm:$0xff]
    %v941 = vld [vmem:[%s8 + $0x20] sm:$0xff]
    %v942 = vld [vmem:[%s8 + $0x28] sm:$0xff]
    %v943 = vld [vmem:[%s8 + $0x30] sm:$0xff]
    %v944 = vld [vmem:[%s8 + $0x38] sm:$0xff]
    %v945 = vld [vmem:[%s9] sm:$0x1]
    %v947 = vlaneseq
    %v948 = vshrl.u32 %v947, 7
    %v949 = vsub.s32 0, %v948
    %v950 = vrot.slane %v945, %v949
    %v953 = vsel %vm337, %v935, 0
    %v956 = vsel %vm337, %v936, 0
    %958 = vmatprep.subr.mxu0 0.0
    %959 = vmatpush1.msra.mxu0 %v937
    %960 = vmatprep.subr.mxu0 0.0
    %961 = vmatpush1.msra.mxu0 %v938
    %962 = vmatprep.subr.mxu0 0.0
    %963 = vmatpush1.msra.mxu0 %v939
    %964 = vmatprep.subr.mxu0 0.0
    %965 = vmatpush1.msra.mxu0 %v940
    %966 = vmatprep.subr.mxu0 0.0
    %967 = vmatpush1.msra.mxu0 %v941
    %968 = vmatprep.subr.mxu0 0.0
    %969 = vmatpush1.msra.mxu0 %v942
    %970 = vmatprep.subr.mxu0 0.0
    %971 = vmatpush1.msra.mxu0 %v943
    %972 = vmatprep.subr.mxu0 0.0
    %973 = vmatpush1.msra.mxu0 %v944
    %974 = vmatprep.subr.mxu0 0.0
    %975 = vmatpush1.msra.mxu0 0.0
    %976 = vmatprep.subr.mxu0 0.0
    %977 = vmatpush1.msra.mxu0 0.0
    %978 = vmatprep.subr.mxu0 0.0
    %979 = vmatpush1.msra.mxu0 0.0
    %980 = vmatprep.subr.mxu0 0.0
    %981 = vmatpush1.msra.mxu0 0.0
    %982 = vmatprep.subr.mxu0 0.0
    %983 = vmatpush1.msra.mxu0 0.0
    %984 = vmatprep.subr.mxu0 0.0
    %985 = vmatpush1.msra.mxu0 0.0
    %986 = vmatprep.subr.mxu0 0.0
    %987 = vmatpush1.msra.mxu0 0.0
    %988 = vmatprep.subr.mxu0 0.0
    %989 = vmatpush1.msra.mxu0 0.0
    %990 = vmatprep.subr.mxu0 0.0
    %991 = vmatpush1.msra.mxu0 0.0
    %992 = vmatprep.subr.mxu0 0.0
    %993 = vmatpush1.msra.mxu0 0.0
    %994 = vmatprep.subr.mxu0 0.0
    %995 = vmatpush1.msra.mxu0 0.0
    %996 = vmatprep.subr.mxu0 0.0
    %997 = vmatpush1.msra.mxu0 0.0
    %998 = vmatprep.subr.mxu0 0.0
    %999 = vmatpush1.msra.mxu0 0.0
    %1000 = vmatprep.subr.mxu0 0.0
    %1001 = vmatpush1.msra.mxu0 0.0
    %1002 = vmatprep.subr.mxu0 0.0
    %1003 = vmatpush1.msra.mxu0 0.0
    %1004 = vmatprep.subr.mxu0 0.0
    %1005 = vmatpush1.msra.mxu0 0.0
    %1006 = vmatprep.subr.mxu0 0.0
    %1007 = vmatpush1.msra.mxu0 0.0
    %1008 = vmatprep.subr.mxu0 0.0
    %1009 = vmatpush1.msra.mxu0 0.0
    %1010 = vmatprep.subr.mxu0 0.0
    %1011 = vmatpush1.msra.mxu0 0.0
    %1012 = vmatprep.subr.mxu0 0.0
    %1013 = vmatpush1.msra.mxu0 0.0
    %1014 = vmatprep.subr.mxu0 0.0
    %1015 = vmatpush1.msra.mxu0 0.0
    %1016 = vmatprep.subr.mxu0 0.0
    %1017 = vmatpush1.msra.mxu0 0.0
    %1018 = vmatprep.subr.mxu0 0.0
    %1019 = vmatpush1.msra.mxu0 0.0
    %1020 = vmatprep.subr.mxu0 0.0
    %1021 = vmatpush1.msra.mxu0 0.0
    %1022 = vmatprep.mubr.f32.mxu0 0.0
    %1023 = vmatmul.mubr.f32.gmra.mrb[0].mxu0 %v953
    %v1024 = vpop.f32.mrb[0].mxu0
    %v1025 = vadd.f32 %v950, %v1024
    %v1026 = vpop.f32.mrb[0].mxu0
    %1027 = vmatprep.mubr.f32.mxu0 0.0
    %1028 = vmatmul.mubr.f32.gmra.mrb[0].mxu0 %v956
    %v1029 = vpop.f32.mrb[0].mxu0
    %v1030 = vadd.f32 %v950, %v1029
    %v1031 = vpop.f32.mrb[0].mxu0
    %1032 = vdwg.mxu0
    %vm1033 = vcmask 72704
    %v1034 = vsel %vm1033, %v1025, -inf
    %1035 = vmax.xlane.f32.xlu0 %v1034
    %v1036 = vpop.xlane.xlu0 %1035
    %v1037 = vsel %vm1033, %v1030, -inf
    %1038 = vmax.xlane.f32.xlu0 %v1037
    %v1039 = vpop.xlane.xlu0 %1038
    %vm1040 = vcmp.ge.f32.partialorder %v1025, %v1036
    %vm1041 = vcmp.ge.f32.partialorder %v1030, %v1039
    %v1042 = vsel %vm1040, %v52, 9
    %v1043 = vsel %vm1041, %v52, 9
    %v1044 = vsel %vm1033, %v1042, 2147483647
    %v1045 = vand.u32 %v1044, 65535
    %v1046 = vshra.s32 %v1044, 16
    %v1047 = vcvt.s32.f32 %v1045
    %v1048 = vcvt.s32.f32 %v1046
    %1049 = vmin.xlane.f32.xlu0 %v1048
    %v1050 = vpop.xlane.xlu0 %1049
    %vm1051 = vcmp.eq.f32.partialorder %v1048, %v1050
    %v1052 = vsel %vm1051, %v1047, inf
    %1053 = vmin.xlane.f32.xlu0 %v1052
    %v1054 = vpop.xlane.xlu0 %1053
    %v1055 = vcvt.f32.s32 %v1054
    %v1056 = vcvt.f32.s32 %v1050
    %v1057 = vshll.u32 %v1056, 16
    %v1058 = vadd.s32 %v1057, %v1055
    %v1059 = vsel %vm1033, %v1043, 2147483647
    %v1060 = vand.u32 %v1059, 65535
    %v1061 = vshra.s32 %v1059, 16
    %v1062 = vcvt.s32.f32 %v1060
    %v1063 = vcvt.s32.f32 %v1061
    %1064 = vmin.xlane.f32.xlu0 %v1063
    %v1065 = vpop.xlane.xlu0 %1064
    %vm1066 = vcmp.eq.f32.partialorder %v1063, %v1065
    %v1067 = vsel %vm1066, %v1062, inf
    %1068 = vmin.xlane.f32.xlu0 %v1067
    %v1069 = vpop.xlane.xlu0 %1068
    %v1070 = vcvt.f32.s32 %v1069
    %v1071 = vcvt.f32.s32 %v1065
    %v1072 = vshll.u32 %v1071, 16
    %v1073 = vadd.s32 %v1072, %v1070
    %v1074 = vmul.u32 %v1058, %v49
    %v1075 = vmul.u32 %v1073, %v50
    %vm1076 = vcmp.eq.s32.totalorder %v268, %v52
    %vm1077 = vcmp.eq.s32.totalorder %v269, %v52
    %v1078 = vcvt.s32.f32 %v1074
    %v1079 = vcvt.s32.f32 %v1075
    %1081 = vset.pattern.permute.xlu0 2
    %1082 = vperm.xlu0 %1081, %v1078
    %v1083 = vpop.permute.xlu0 %1082
    %1086 = vset.pattern.permute.xlu0 2
    %1087 = vperm.xlu0 %1086, %v1079
    %v1088 = vpop.permute.xlu0 %1087
    %v1090 = vsel %vm1076, %v1083, 0.0
    %v1091 = vsel %vm1077, %v1088, 0.0
    %vm1092 = vcmask 130048
    %v1093 = vsel %vm1092, %v1090, 0.0
    %v1094 = vsel %vm1092, %v1091, 0.0
    %v1095 = vadd.f32 %v1093, %v1094
    %v1096 = vrot.slane %v1095, 4
    %v1097 = vadd.f32 %v1095, %v1096
    %v1098 = vrot.slane %v1097, 2
    %v1099 = vadd.f32 %v1097, %v1098
    %v1100 = vrot.slane %v1099, 1
    %v1101 = vadd.f32 %v1099, %v1100
    %v1102 = vcvt.f32.s32.to.zero.pseudo %v1101
    %vm1103 = vcmask 122880
    %1104 = vst.msk [vmem:[%s10] sm:$0x1] %vm1103, %v1102
    // Predicated region
    $region46: #{seqmodel_forward.1} parent=1 // pred_check
      _
    $region47: #{seqmodel_forward.1} parent=1 // pred_check_branch
      %1106 = sbr.rel (0) target = $region49
    $region48: #{seqmodel_forward.1} parent=1 // pred_region
      _
    $region49: #{seqmodel_forward.1} parent=1 // pred_fallthru
      _
    // Predicated region
    $region50: #{seqmodel_forward.1} parent=1 // pred_check
      _
    $region51: #{seqmodel_forward.1} parent=1 // pred_check_branch
      %1108 = sbr.rel (0) target = $region53
    $region52: #{seqmodel_forward.1} parent=1 // pred_region
      _
    $region53: #{seqmodel_forward.1} parent=1 // pred_fallthru
      _
    %1109 = vsyncpa [#allocation3], 1

</llo_original>
